<compile_context>
chip_gen: v7x
topology: tpu7x:2x2x1
jax: 0.10.0
libtpu: 0.0.40
codegen_flags: <defaults>
</compile_context>

<pallas_src>
import jax
import jax.numpy as jnp
from jax import lax
from jax.experimental import pallas as pl
from jax.experimental.pallas import tpu as pltpu

EMBED = 512          # embed_dim (default arg of VETMoLayer)
VNN_IN = 768         # nn.Linear(768, embed_dim)
MAP_OUT = 256        # nn.Linear(embed_dim, 256)
N_HEADS = 8
HEAD_DIM = EMBED // N_HEADS
LN_EPS = 1e-5        # PyTorch nn.LayerNorm default

ROW_TM = 512         # max row-tile for the vnn projection
ATTN_BB = 8          # batch-block of the fused attention+MLP kernel (mult. of 8)


# ----------------------------- in-kernel helpers ----------------------------

def _layernorm(x, g, b):
    mean = jnp.mean(x, axis=-1, keepdims=True)
    xc = x - mean
    var = jnp.mean(xc * xc, axis=-1, keepdims=True)
    return xc * lax.rsqrt(var + LN_EPS) * g + b


def _gelu(x):
    # exact (erf) GELU, matching nn.GELU() default
    return 0.5 * x * (1.0 + lax.erf(x * 0.7071067811865476))


# ----------------------------- Pallas kernels -------------------------------

def _vnn_kernel(x_ref, w_ref, b_ref, o_ref):
    o_ref[...] = (jnp.dot(x_ref[...].astype(jnp.bfloat16), w_ref[...],
                          preferred_element_type=jnp.float32)
                  + b_ref[...]).astype(o_ref.dtype)


def _vnn_res_kernel(x_ref, w_ref, b_ref, r_ref, o_ref):
    o_ref[...] = (jnp.dot(x_ref[...].astype(jnp.bfloat16), w_ref[...],
                          preferred_element_type=jnp.float32)
                  + b_ref[...] + r_ref[...]).astype(o_ref.dtype)


def _attn_mlp_core(x1_ref, q_ref, m_ref,
                   wqkv_ref, bqkv_ref, wo_ref, bo_ref,
                   g1_ref, b1_ref, w1_ref, c1_ref, w2_ref, c2_ref,
                   attn_sc):
    """Batch-blocked attention + MLP residual.  Returns y2 (pre-final-norm).

    x1_ref: (BB*S, E) flat rows for BB batch elements, q_ref: (BB, E) pooled
    query tokens (keys/values only; their outputs are dropped), m_ref: (BB, S)
    key-padding mask for the x tokens.  The query-token key is always kept.
    """
    BB, S = m_ref.shape
    x1 = x1_ref[...]                                              # (BB*S, E) f32

    # fused QKV projection on the whole row slab (bf16 MXU, f32 accumulate);
    # the 1/sqrt(head_dim) scale is pre-folded into the q columns of wqkv.
    qkv_x = (jnp.dot(x1.astype(jnp.bfloat16), wqkv_ref[...],
                     preferred_element_type=jnp.float32)
             + bqkv_ref[...]).astype(jnp.bfloat16)                # (BB*S, 3E)
    qkv_q = (jnp.dot(q_ref[...].astype(jnp.bfloat16), wqkv_ref[...],
                     preferred_element_type=jnp.float32)
             + bqkv_ref[...]).astype(jnp.bfloat16)                # (BB, 3E)

    ddn = (((1,), (1,)), ((), ()))        # contract last dims (no explicit k.T)

    for b in range(BB):                                           # static unroll
        qkv_b = qkv_x[b * S:(b + 1) * S, :]                       # (S, 3E)
        qkv_qb = qkv_q[b:b + 1, :]                                # (1, 3E)
        keep = m_ref[b:b + 1, :] > 0                              # (1, S)
        acc = None
        for h in range(N_HEADS):                                  # static unroll
            lo = h * HEAD_DIM
            qh = qkv_b[:, lo:lo + HEAD_DIM]                       # (S, hd)
            kh = qkv_b[:, EMBED + lo:EMBED + lo + HEAD_DIM]       # (S, hd)
            vh = qkv_b[:, 2 * EMBED + lo:2 * EMBED + lo + HEAD_DIM]
            kqh = qkv_qb[:, EMBED + lo:EMBED + lo + HEAD_DIM]     # (1, hd)
            vqh = qkv_qb[:, 2 * EMBED + lo:2 * EMBED + lo + HEAD_DIM]

            s_x = lax.dot_general(qh, kh, ddn,
                                  preferred_element_type=jnp.float32)   # (S, S)
            s_q = lax.dot_general(qh, kqh, ddn,
                                  preferred_element_type=jnp.float32)   # (S, 1)
            s_x = jnp.where(keep, s_x, -1e9)
            m = jnp.maximum(jnp.max(s_x, axis=-1, keepdims=True), s_q)
            p_x = jnp.exp(s_x - m)
            p_q = jnp.exp(s_q - m)
            inv = 1.0 / (jnp.sum(p_x, axis=-1, keepdims=True) + p_q)    # exact
            ctx = (jnp.dot(p_x.astype(jnp.bfloat16), vh,
                           preferred_element_type=jnp.float32)
                   + p_q * vqh.astype(jnp.float32)) * inv               # (S, hd)
            # per-head accumulation into the output projection (sublane-aligned
            # wo row slice, no 64-lane concat)
            contrib = jnp.dot(ctx.astype(jnp.bfloat16),
                              wo_ref[lo:lo + HEAD_DIM, :],
                              preferred_element_type=jnp.float32)       # (S, E)
            acc = contrib if acc is None else acc + contrib
        attn_sc[b * S:(b + 1) * S, :] = acc

    # residual + output-proj bias on the whole slab, then LN1 + MLP residual
    y = x1.astype(jnp.float32) + attn_sc[...] + bo_ref[...]
    h1 = _layernorm(y, g1_ref[...], b1_ref[...])
    u = _gelu(jnp.dot(h1.astype(jnp.bfloat16), w1_ref[...],
                      preferred_element_type=jnp.float32) + c1_ref[...])
    y2 = h1 + jnp.dot(u.astype(jnp.bfloat16), w2_ref[...],
                      preferred_element_type=jnp.float32) + c2_ref[...]
    return y2


def _layer_kernel_mid(x1_ref, q_ref, m_ref, wqkv_ref, bqkv_ref, wo_ref, bo_ref,
                      g1_ref, b1_ref, w1_ref, c1_ref, w2_ref, c2_ref,
                      g2_ref, b2_ref, o_ref, attn_sc):
    y2 = _attn_mlp_core(x1_ref, q_ref, m_ref, wqkv_ref, bqkv_ref, wo_ref, bo_ref,
                        g1_ref, b1_ref, w1_ref, c1_ref, w2_ref, c2_ref, attn_sc)
    o_ref[...] = _layernorm(y2, g2_ref[...], b2_ref[...]).astype(o_ref.dtype)


def _layer_kernel_last(x1_ref, q_ref, m_ref, wqkv_ref, bqkv_ref, wo_ref, bo_ref,
                       g1_ref, b1_ref, w1_ref, c1_ref, w2_ref, c2_ref,
                       wm_ref, cm_ref, gn_ref, bn_ref, o_ref, attn_sc):
    y2 = _attn_mlp_core(x1_ref, q_ref, m_ref, wqkv_ref, bqkv_ref, wo_ref, bo_ref,
                        g1_ref, b1_ref, w1_ref, c1_ref, w2_ref, c2_ref, attn_sc)
    z = jnp.dot(y2.astype(jnp.bfloat16), wm_ref[...],
                preferred_element_type=jnp.float32) + cm_ref[...]
    o_ref[...] = _layernorm(z, gn_ref[...], bn_ref[...]).astype(o_ref.dtype)


# ------------------------------ wrappers -------------------------------------

def _row_tile(n, cap):
    return n if n <= cap else cap


def vnn_project(x, w, b, residual=None):
    """Row-tiled x @ w + b (+ residual); weights bf16, accumulate in f32."""
    n, din = x.shape
    dout = w.shape[1]
    tm = _row_tile(n, ROW_TM)
    row = lambda i: (i, 0)
    rep = lambda i: (0, 0)
    specs = [pl.BlockSpec((tm, din), row),
             pl.BlockSpec((din, dout), rep),
             pl.BlockSpec((1, dout), rep)]
    args = [x, w, b.reshape(1, dout)]
    kern = _vnn_kernel
    if residual is not None:
        specs.append(pl.BlockSpec((tm, dout), row))
        args.append(residual)
        kern = _vnn_res_kernel
    return pl.pallas_call(
        kern,
        out_shape=jax.ShapeDtypeStruct((n, dout), x.dtype),
        grid=(pl.cdiv(n, tm),),
        in_specs=specs,
        out_specs=pl.BlockSpec((tm, dout), row),
        compiler_params=pltpu.CompilerParams(
            dimension_semantics=("parallel",),
            vmem_limit_bytes=32 * 1024 * 1024),
    )(*args)


def fused_layer(x1, q, mask, params, is_last_layer):
    """Batch-blocked fused attention + MLP + final norm (+ mapping).

    x1: (B*S, E) flat vnn output, q: (B, E) pooled query tokens, mask: (B, S).
    Returns (B*S, E) or (B*S, 256)."""
    B, S = mask.shape
    E = EMBED
    BB = B if B <= ATTN_BB else ATTN_BB      # BB is B or a multiple of 8
    RB = BB * S
    n = x1.shape[0]
    grid = (pl.cdiv(B, BB),)
    row = lambda g: (g, 0)
    rep = lambda g: (0, 0)

    common_specs = [
        pl.BlockSpec((RB, E), row),            # x1 rows (BB batches)
        pl.BlockSpec((BB, E), row),            # pooled query tokens
        pl.BlockSpec((BB, S), row),            # key-padding mask
        pl.BlockSpec((E, 3 * E), rep),         # wqkv (bf16, scale folded)
        pl.BlockSpec((1, 3 * E), rep),         # bqkv
        pl.BlockSpec((E, E), rep),             # wo (bf16)
        pl.BlockSpec((1, E), rep),             # bo
        pl.BlockSpec((1, E), rep),             # ln1 gamma
        pl.BlockSpec((1, E), rep),             # ln1 beta
        pl.BlockSpec((E, 4 * E), rep),         # fc1 w (bf16)
        pl.BlockSpec((1, 4 * E), rep),         # fc1 b
        pl.BlockSpec((4 * E, E), rep),         # fc2 w (bf16)
        pl.BlockSpec((1, E), rep),             # fc2 b
    ]
    common_args = [x1, q, mask,
                   params['wqkv'], params['bqkv'],
                   params['wo'], params['bo'].reshape(1, E),
                   params['ln1_g'].reshape(1, E), params['ln1_b'].reshape(1, E),
                   params['fc1_w'], params['fc1_b'].reshape(1, 4 * E),
                   params['fc2_w'], params['fc2_b'].reshape(1, E)]
    cp = pltpu.CompilerParams(dimension_semantics=("parallel",),
                              vmem_limit_bytes=40 * 1024 * 1024)
    scratch = [pltpu.VMEM((RB, E), jnp.float32)]

    if is_last_layer:
        specs = common_specs + [pl.BlockSpec((E, MAP_OUT), rep),
                                pl.BlockSpec((1, MAP_OUT), rep),
                                pl.BlockSpec((1, MAP_OUT), rep),
                                pl.BlockSpec((1, MAP_OUT), rep)]
        args = common_args + [params['map_w'],
                              params['map_b'].reshape(1, MAP_OUT),
                              params['n256_g'].reshape(1, MAP_OUT),
                              params['n256_b'].reshape(1, MAP_OUT)]
        return pl.pallas_call(
            _layer_kernel_last,
            out_shape=jax.ShapeDtypeStruct((n, MAP_OUT), x1.dtype),
            grid=grid, in_specs=specs,
            out_specs=pl.BlockSpec((RB, MAP_OUT), row),
            scratch_shapes=scratch,
            compiler_params=cp,
        )(*args)

    specs = common_specs + [pl.BlockSpec((1, E), rep), pl.BlockSpec((1, E), rep)]
    args = common_args + [params['n2_g'].reshape(1, E),
                          params['n2_b'].reshape(1, E)]
    return pl.pallas_call(
        _layer_kernel_mid,
        out_shape=jax.ShapeDtypeStruct((n, E), x1.dtype),
        grid=grid, in_specs=specs,
        out_specs=pl.BlockSpec((RB, E), row),
        scratch_shapes=scratch,
        compiler_params=cp,
    )(*args)


def pool_query(query):
    """q[i] = mean(query[i, :t]) where t is the first row with query[i,t,0]==+inf,
    else zeros — vectorized version of the Python double loop (plain-JAX glue).
    TODO(synk): returns 0 when the sentinel is absent or at t=0 (torch would
    leave 0 / produce NaN respectively)."""
    B, T, _ = query.shape
    col0 = query[:, :, 0]
    is_inf = jnp.isposinf(col0)
    has_inf = jnp.any(is_inf, axis=1)
    t = jnp.argmax(is_inf, axis=1)                         # first inf index
    cums = jnp.cumsum(query, axis=1)
    idx = jnp.clip(t - 1, 0, T - 1)
    summed = jnp.take_along_axis(cums, idx[:, None, None], axis=1)[:, 0, :]
    mean = summed / jnp.maximum(t, 1).astype(query.dtype)[:, None]
    return jnp.where((has_inf & (t > 0))[:, None], mean, 0.0)   # (B, 512)


def vetmo_forward(x, query, mask, params, x2=None, is_last_layer=False):
    B, S, _ = x.shape
    q = pool_query(query).astype(x.dtype)                        # (B, 512)

    # vnn projection (+ optional fused x2 residual); keep the slab flat
    res = None if x2 is None else x2.reshape(B * S, EMBED)
    x1 = vnn_project(x.reshape(B * S, VNN_IN),
                     params['vnn_w'], params['vnn_b'], residual=res)

    # fused attention + MLP + final norm; query token passed separately (no
    # HBM concat, always-kept key) and its output row is never produced.
    out = fused_layer(x1, q, mask, params, is_last_layer)
    if is_last_layer:
        return out.reshape(B, S, MAP_OUT)
    return out.reshape(B, S, EMBED)


# ------------------------------ parameters -----------------------------------

def init_params(key):
    keys = jax.random.split(key, 8)

    def lin(k, din, dout):
        w = 0.02 * jax.random.normal(k, (din, dout), jnp.float32)
        return w, jnp.zeros((dout,), jnp.float32)

    p = {}
    p['vnn_w'], p['vnn_b'] = lin(keys[0], VNN_IN, EMBED)
    p['map_w'], p['map_b'] = lin(keys[1], EMBED, MAP_OUT)
    p['wq'], p['bq'] = lin(keys[2], EMBED, EMBED)
    p['wk'], p['bk'] = lin(keys[3], EMBED, EMBED)
    p['wv'], p['bv'] = lin(keys[4], EMBED, EMBED)
    p['wo'], p['bo'] = lin(keys[5], EMBED, EMBED)
    p['fc1_w'], p['fc1_b'] = lin(keys[6], EMBED, 4 * EMBED)
    p['fc2_w'], p['fc2_b'] = lin(keys[7], 4 * EMBED, EMBED)
    p['ln1_g'] = jnp.ones((EMBED,), jnp.float32)
    p['ln1_b'] = jnp.zeros((EMBED,), jnp.float32)
    p['n256_g'] = jnp.ones((MAP_OUT,), jnp.float32)
    p['n256_b'] = jnp.zeros((MAP_OUT,), jnp.float32)
    p['n2_g'] = jnp.ones((EMBED,), jnp.float32)
    p['n2_b'] = jnp.zeros((EMBED,), jnp.float32)
    return p


def prep_params(p):
    """Fuse q/k/v weights into one (E, 3E) matmul, fold 1/sqrt(hd) into the q
    columns (in f32), then cast all matmul weights to bf16 (MXU native)."""
    scale = 1.0 / (HEAD_DIM ** 0.5)
    p = dict(p)
    wqkv = jnp.concatenate([p['wq'] * scale, p['wk'], p['wv']], axis=1)
    p['wqkv'] = wqkv.astype(jnp.bfloat16)
    p['bqkv'] = jnp.concatenate(
        [p['bq'] * scale, p['bk'], p['bv']]).reshape(1, 3 * EMBED)
    for k in ('vnn_w', 'wo', 'fc1_w', 'fc2_w', 'map_w'):
        p[k] = p[k].astype(jnp.bfloat16)
    return p


# --------------------------------- main ---------------------------------------

if __name__ == "__main__":
    key = jax.random.PRNGKey(0)
    kp, kx, kq, kx2 = jax.random.split(key, 4)

    B, S, Tq = 2, 8, 6
    params = prep_params(init_params(kp))

    x = jax.random.normal(kx, (B, S, VNN_IN), jnp.float32)
    query = jax.random.normal(kq, (B, Tq, EMBED), jnp.float32)
    # +inf sentinel in feature 0 marks the end of each query sequence
    query = query.at[0, 3, 0].set(jnp.inf)
    query = query.at[1, 5, 0].set(jnp.inf)
    mask = jnp.ones((B, S), jnp.float32)
    mask = mask.at[1, 6:].set(0.0)           # a couple of padded key tokens
    x2 = 0.1 * jax.random.normal(kx2, (B, S, EMBED), jnp.float32)

    out_last = vetmo_forward(x, query, mask, params, x2=x2, is_last_layer=True)
    out_mid = vetmo_forward(x, query, mask, params, x2=None, is_last_layer=False)
    out_last, out_mid = jax.block_until_ready((out_last, out_mid))

    assert out_last.shape == (B, S, MAP_OUT), out_last.shape
    assert out_mid.shape == (B, S, EMBED), out_mid.shape
    assert bool(jnp.all(jnp.isfinite(out_last)))
    assert bool(jnp.all(jnp.isfinite(out_mid)))
    print("KERNEL_OK")
</pallas_src>

<mosaic_0001>
module attributes {stable_mosaic.version = 11 : i64} {
  func.func @_vnn_res_kernel(%arg0: i32, %arg1: memref<16x768xf32, #tpu.memory_space<vmem>>, %arg2: memref<768x512xbf16, #tpu.memory_space<vmem>>, %arg3: memref<1x512xf32, #tpu.memory_space<vmem>>, %arg4: memref<16x512xf32, #tpu.memory_space<vmem>>, %arg5: memref<16x512xf32, #tpu.memory_space<vmem>>) attributes {dimension_semantics = [#tpu.dimension_semantics<parallel>], iteration_bounds = array<i64: 1>, scalar_prefetch = 0 : i64, scratch_operands = 0 : i64, tpu.core_type = #tpu.core_type<tc>, window_params = [{transform_indices = @transform_0, window_bounds = array<i64: 16, 768>}, {pipeline_mode = #tpu.pipeline_mode<synchronous>, transform_indices = @transform_1, window_bounds = array<i64: 768, 512>}, {pipeline_mode = #tpu.pipeline_mode<synchronous>, transform_indices = @transform_2, window_bounds = array<i64: 1, 512>}, {transform_indices = @transform_3, window_bounds = array<i64: 16, 512>}, {transform_indices = @transform_4, window_bounds = array<i64: 16, 512>}]} {
    %c0 = arith.constant 0 : index
    %c0_0 = arith.constant 0 : index
    %0 = vector.load %arg1[%c0, %c0_0] : memref<16x768xf32, #tpu.memory_space<vmem>>, vector<16x768xf32>
    %1 = arith.truncf %0 : vector<16x768xf32> to vector<16x768xbf16>
    %c0_1 = arith.constant 0 : index
    %c0_2 = arith.constant 0 : index
    %2 = vector.load %arg2[%c0_1, %c0_2] : memref<768x512xbf16, #tpu.memory_space<vmem>>, vector<768x512xbf16>
    %cst = arith.constant dense<0.000000e+00> : vector<16x512xf32>
    %3 = tpu.matmul %1, %2, %cst {dimension_numbers = #tpu.dot_dimension_numbers<[1], [0], [0], [1], [0, 0, 1, 1], [], []>} : vector<16x768xbf16>, vector<768x512xbf16>, vector<16x512xf32> -> vector<16x512xf32>
    %c0_3 = arith.constant 0 : index
    %c0_4 = arith.constant 0 : index
    %4 = vector.load %arg3[%c0_3, %c0_4] : memref<1x512xf32, #tpu.memory_space<vmem>>, vector<1x512xf32>
    %5 = vector.broadcast %4 : vector<1x512xf32> to vector<16x512xf32>
    %6 = arith.addf %3, %5 : vector<16x512xf32>
    %c0_5 = arith.constant 0 : index
    %c0_6 = arith.constant 0 : index
    %7 = vector.load %arg4[%c0_5, %c0_6] : memref<16x512xf32, #tpu.memory_space<vmem>>, vector<16x512xf32>
    %8 = arith.addf %6, %7 : vector<16x512xf32>
    %c0_7 = arith.constant 0 : index
    %c0_8 = arith.constant 0 : index
    %9 = vector.load %arg5[%c0_7, %c0_8] : memref<16x512xf32, #tpu.memory_space<vmem>>, vector<16x512xf32>
    tpu.vector_store %arg5[%c0_7, %c0_8], %8 {strides = array<i32>} : memref<16x512xf32, #tpu.memory_space<vmem>>, vector<16x512xf32>,
    return
  }
  func.func @transform_0(%arg0: i32) -> (i32, i32) {
    %c0_i32 = arith.constant 0 : i32
    %c0_i32_0 = arith.constant 0 : i32
    return %arg0, %c0_i32 : i32, i32
  }
  func.func @transform_1(%arg0: i32) -> (i32, i32) {
    %c0_i32 = arith.constant 0 : i32
    %c0_i32_0 = arith.constant 0 : i32
    %c0_i32_1 = arith.constant 0 : i32
    return %c0_i32, %c0_i32_0 : i32, i32
  }
  func.func @transform_2(%arg0: i32) -> (i32, i32) {
    %c0_i32 = arith.constant 0 : i32
    %c0_i32_0 = arith.constant 0 : i32
    %c0_i32_1 = arith.constant 0 : i32
    return %c0_i32, %c0_i32_0 : i32, i32
  }
  func.func @transform_3(%arg0: i32) -> (i32, i32) {
    %c0_i32 = arith.constant 0 : i32
    %c0_i32_0 = arith.constant 0 : i32
    return %arg0, %c0_i32 : i32, i32
  }
  func.func @transform_4(%arg0: i32) -> (i32, i32) {
    %c0_i32 = arith.constant 0 : i32
    %c0_i32_0 = arith.constant 0 : i32
    return %arg0, %c0_i32 : i32, i32
  }
}

</mosaic_0001>

<llo_original>
// kernel: tpu_custom_call.1
$region0: #{tpu_custom_call.1}
  #allocation0 [shape = 'u32[]', space=smem, size = 0x4, offset = 0x4, fixed_abs, tag = 'smem constant byte address 0x4 - core index']
  #allocation1 [shape = 'u32[144,128]{1,0:T(1,128)}', space=vmem, size = 0x12000, scoped, tag = 'internal scratch']
  %s0 = inlined_call_operand.hbm [shape: f32[16,768], index: 0, kind: input, shape index: {}]
  %s1 = inlined_call_operand.hbm [shape: bf16[768,512], index: 1, kind: input, shape index: {}]
  %s2 = inlined_call_operand.vmem [shape: f32[1,512], index: 2, kind: input, shape index: {}]
  %s3 = inlined_call_operand.hbm [shape: f32[16,512], index: 3, kind: input, shape index: {}]
  %s4 = inlined_call_operand.hbm [shape: f32[16,512], index: 4, kind: output, shape index: {}]
  %s5 = sld [smem:[#allocation0]]
  $region38: #{tpu_custom_call.1} parent=0
    _
  %s7 = ssub.s32 1, %s5
  %s8 = scalar_select 0, %s7, %s5
  $region1: #{tpu_custom_call.1} parent=0
    #allocation2 [shape = 'u8[49152]{0}', space=vmem, size = 0xc000, scoped, tag = 'input window, operand 0, single buffered']
    #allocation3 [shape = 's32[1]{0}', space=sflag, size = 0x4, scoped, tag = 'scoped memory for tpu_custom_call.1']
    #allocation4 [shape = 's32[1]{0}', space=sflag, size = 0x4, scoped, tag = 'scoped memory for tpu_custom_call.1']
    #allocation5 [shape = 'u8[786432]{0}', space=vmem, size = 0xc0000, scoped, tag = 'input window, operand 1, single buffered']
    #allocation6 [shape = 's32[1]{0}', space=sflag, size = 0x4, scoped, tag = 'scoped memory for tpu_custom_call.1']
    #allocation7 [shape = 'u8[32768]{0}', space=vmem, size = 0x8000, scoped, tag = 'input window, operand 3, single buffered']
    #allocation8 [shape = 'u8[32768]{0}', space=vmem, size = 0x8000, scoped, tag = 'output window, operand 0, single buffered']
    %9 = vsyncpa [#allocation3], 0
    %10 = vsyncpa [#allocation6], 0
    %11 = vsyncpa [#allocation4], 0
    // Predicated region
    $region2: #{tpu_custom_call.1} parent=1 // pred_check
      _
    $region3: #{tpu_custom_call.1} parent=1 // pred_check_branch
      %13 = sbr.rel (0) target = $region5
    $region4: #{tpu_custom_call.1} parent=1 // pred_region
      %s15 = ssub.s32 1536, 1536
      %16 = vsyncadd [#allocation3], %s15
      %s17 = sshll.u32 [#allocation2], 4
      %s18 = int_to_ptr.vmem [resolvable:$true] %s17
      %23 = dma.hbm_to_vmem [thread:$0]  %s0, 1536, %s18, [#allocation3], 768, 768, 48
    $region5: #{tpu_custom_call.1} parent=1 // pred_fallthru
      _
    // Predicated region
    $region6: #{tpu_custom_call.1} parent=1 // pred_check
      _
    $region7: #{tpu_custom_call.1} parent=1 // pred_check_branch
      %25 = sbr.rel (0) target = $region9
    $region8: #{tpu_custom_call.1} parent=1 // pred_region
      %s27 = ssub.s32 24576, 24576
      %28 = vsyncadd [#allocation6], %s27
      %s29 = sshll.u32 [#allocation5], 4
      %s30 = int_to_ptr.vmem [resolvable:$true] %s29
      %35 = dma.hbm_to_vmem [thread:$0]  %s1, 24576, %s30, [#allocation6], 256, 256, 16
    $region9: #{tpu_custom_call.1} parent=1 // pred_fallthru
      _
    // Predicated region
    $region10: #{tpu_custom_call.1} parent=1 // pred_check
      _
    $region11: #{tpu_custom_call.1} parent=1 // pred_check_branch
      %37 = sbr.rel (0) target = $region13
    $region12: #{tpu_custom_call.1} parent=1 // pred_region
      _
    $region13: #{tpu_custom_call.1} parent=1 // pred_fallthru
      _
    // Predicated region
    $region14: #{tpu_custom_call.1} parent=1 // pred_check
      _
    $region15: #{tpu_custom_call.1} parent=1 // pred_check_branch
      %39 = sbr.rel (0) target = $region17
    $region16: #{tpu_custom_call.1} parent=1 // pred_region
      %s41 = ssub.s32 1024, 1024
      %42 = vsyncadd [#allocation6], %s41
      %s43 = sshll.u32 [#allocation7], 4
      %s44 = int_to_ptr.vmem [resolvable:$true] %s43
      %49 = dma.hbm_to_vmem [thread:$0]  %s3, 1024, %s44, [#allocation6], 512, 512, 32
    $region17: #{tpu_custom_call.1} parent=1 // pred_fallthru
      _
    // Predicated region
    $region18: #{tpu_custom_call.1} parent=1 // pred_check
      _
    $region19: #{tpu_custom_call.1} parent=1 // pred_check_branch
      %51 = sbr.rel (0) target = $region21
    $region20: #{tpu_custom_call.1} parent=1 // pred_region
      %52 = dma.done [#allocation3], 1536
    $region21: #{tpu_custom_call.1} parent=1 // pred_fallthru
      _
    // Predicated region
    $region22: #{tpu_custom_call.1} parent=1 // pred_check
      _
    $region23: #{tpu_custom_call.1} parent=1 // pred_check_branch
      %54 = sbr.rel (0) target = $region25
    $region24: #{tpu_custom_call.1} parent=1 // pred_region
      %55 = dma.done [#allocation6], 24576
    $region25: #{tpu_custom_call.1} parent=1 // pred_fallthru
      _
    // Predicated region
    $region26: #{tpu_custom_call.1} parent=1 // pred_check
      _
    $region27: #{tpu_custom_call.1} parent=1 // pred_check_branch
      %57 = sbr.rel (0) target = $region29
    $region28: #{tpu_custom_call.1} parent=1 // pred_region
      %58 = dma.done [#allocation6], 1024
    $region29: #{tpu_custom_call.1} parent=1 // pred_fallthru
      _
    %v59 = vld [vmem:[#allocation2] sm:$0xff]
    %v60 = vld [vmem:[#allocation2 + $0x8] sm:$0xff]
    %v61 = vld [vmem:[#allocation2 + $0x10] sm:$0xff]
    %v62 = vld [vmem:[#allocation2 + $0x18] sm:$0xff]
    %v63 = vld [vmem:[#allocation2 + $0x20] sm:$0xff]
    %v64 = vld [vmem:[#allocation2 + $0x28] sm:$0xff]
    %v65 = vld [vmem:[#allocation2 + $0x30] sm:$0xff]
    %v66 = vld [vmem:[#allocation2 + $0x38] sm:$0xff]
    %v67 = vld [vmem:[#allocation2 + $0x40] sm:$0xff]
    %v68 = vld [vmem:[#allocation2 + $0x48] sm:$0xff]
    %v69 = vld [vmem:[#allocation2 + $0x50] sm:$0xff]
    %v70 = vld [vmem:[#allocation2 + $0x58] sm:$0xff]
    %v71 = vpack.c.bf16 %v65, %v59
    %v72 = vpack.c.bf16 %v66, %v60
    %v73 = vpack.c.bf16 %v67, %v61
    %v74 = vpack.c.bf16 %v68, %v62
    %v75 = vpack.c.bf16 %v69, %v63
    %v76 = vpack.c.bf16 %v70, %v64
    %v77 = vld [vmem:[#allocation5] sm:$0xff]
    %v78 = vld [vmem:[#allocation5 + $0x8] sm:$0xff]
    %v79 = vld [vmem:[#allocation5 + $0x10] sm:$0xff]
    %v80 = vld [vmem:[#allocation5 + $0x18] sm:$0xff]
    %v81 = vld [vmem:[#allocation5 + $0x20] sm:$0xff]
    %v82 = vld [vmem:[#allocation5 + $0x28] sm:$0xff]
    %v83 = vld [vmem:[#allocation5 + $0x30] sm:$0xff]
    %v84 = vld [vmem:[#allocation5 + $0x38] sm:$0xff]
    %v85 = vld [vmem:[#allocation5 + $0x40] sm:$0xff]
    %v86 = vld [vmem:[#allocation5 + $0x48] sm:$0xff]
    %v87 = vld [vmem:[#allocation5 + $0x50] sm:$0xff]
    %v88 = vld [vmem:[#allocation5 + $0x58] sm:$0xff]
    %v89 = vld [vmem:[#allocation5 + $0x60] sm:$0xff]
    %v90 = vld [vmem:[#allocation5 + $0x68] sm:$0xff]
    %v91 = vld [vmem:[#allocation5 + $0x70] sm:$0xff]
    %v92 = vld [vmem:[#allocation5 + $0x78] sm:$0xff]
    %v93 = vld [vmem:[#allocation5 + $0x80] sm:$0xff]
    %v94 = vld [vmem:[#allocation5 + $0x88] sm:$0xff]
    %v95 = vld [vmem:[#allocation5 + $0x90] sm:$0xff]
    %v96 = vld [vmem:[#allocation5 + $0x98] sm:$0xff]
    %v97 = vld [vmem:[#allocation5 + $0xa0] sm:$0xff]
    %v98 = vld [vmem:[#allocation5 + $0xa8] sm:$0xff]
    %v99 = vld [vmem:[#allocation5 + $0xb0] sm:$0xff]
    %v100 = vld [vmem:[#allocation5 + $0xb8] sm:$0xff]
    %v101 = vld [vmem:[#allocation5 + $0xc0] sm:$0xff]
    %v102 = vld [vmem:[#allocation5 + $0xc8] sm:$0xff]
    %v103 = vld [vmem:[#allocation5 + $0xd0] sm:$0xff]
    %v104 = vld [vmem:[#allocation5 + $0xd8] sm:$0xff]
    %v105 = vld [vmem:[#allocation5 + $0xe0] sm:$0xff]
    %v106 = vld [vmem:[#allocation5 + $0xe8] sm:$0xff]
    %v107 = vld [vmem:[#allocation5 + $0xf0] sm:$0xff]
    %v108 = vld [vmem:[#allocation5 + $0xf8] sm:$0xff]
    %v109 = vld [vmem:[#allocation5 + $0x100] sm:$0xff]
    %v110 = vld [vmem:[#allocation5 + $0x108] sm:$0xff]
    %v111 = vld [vmem:[#allocation5 + $0x110] sm:$0xff]
    %v112 = vld [vmem:[#allocation5 + $0x118] sm:$0xff]
    %v113 = vld [vmem:[#allocation5 + $0x120] sm:$0xff]
    %v114 = vld [vmem:[#allocation5 + $0x128] sm:$0xff]
    %v115 = vld [vmem:[#allocation5 + $0x130] sm:$0xff]
    %v116 = vld [vmem:[#allocation5 + $0x138] sm:$0xff]
    %v117 = vld [vmem:[#allocation5 + $0x140] sm:$0xff]
    %v118 = vld [vmem:[#allocation5 + $0x148] sm:$0xff]
    %v119 = vld [vmem:[#allocation5 + $0x150] sm:$0xff]
    %v120 = vld [vmem:[#allocation5 + $0x158] sm:$0xff]
    %v121 = vld [vmem:[#allocation5 + $0x160] sm:$0xff]
    %v122 = vld [vmem:[#allocation5 + $0x168] sm:$0xff]
    %v123 = vld [vmem:[#allocation5 + $0x170] sm:$0xff]
    %v124 = vld [vmem:[#allocation5 + $0x178] sm:$0xff]
    %v125 = vld [vmem:[#allocation5 + $0x180] sm:$0xff]
    %v126 = vld [vmem:[#allocation5 + $0x188] sm:$0xff]
    %v127 = vld [vmem:[#allocation5 + $0x190] sm:$0xff]
    %v128 = vld [vmem:[#allocation5 + $0x198] sm:$0xff]
    %v129 = vld [vmem:[#allocation5 + $0x1a0] sm:$0xff]
    %v130 = vld [vmem:[#allocation5 + $0x1a8] sm:$0xff]
    %v131 = vld [vmem:[#allocation5 + $0x1b0] sm:$0xff]
    %v132 = vld [vmem:[#allocation5 + $0x1b8] sm:$0xff]
    %v133 = vld [vmem:[#allocation5 + $0x1c0] sm:$0xff]
    %v134 = vld [vmem:[#allocation5 + $0x1c8] sm:$0xff]
    %v135 = vld [vmem:[#allocation5 + $0x1d0] sm:$0xff]
    %v136 = vld [vmem:[#allocation5 + $0x1d8] sm:$0xff]
    %v137 = vld [vmem:[#allocation5 + $0x1e0] sm:$0xff]
    %v138 = vld [vmem:[#allocation5 + $0x1e8] sm:$0xff]
    %v139 = vld [vmem:[#allocation5 + $0x1f0] sm:$0xff]
    %v140 = vld [vmem:[#allocation5 + $0x1f8] sm:$0xff]
    %v141 = vld [vmem:[#allocation5 + $0x200] sm:$0xff]
    %v142 = vld [vmem:[#allocation5 + $0x208] sm:$0xff]
    %v143 = vld [vmem:[#allocation5 + $0x210] sm:$0xff]
    %v144 = vld [vmem:[#allocation5 + $0x218] sm:$0xff]
    %v145 = vld [vmem:[#allocation5 + $0x220] sm:$0xff]
    %v146 = vld [vmem:[#allocation5 + $0x228] sm:$0xff]
    %v147 = vld [vmem:[#allocation5 + $0x230] sm:$0xff]
    %v148 = vld [vmem:[#allocation5 + $0x238] sm:$0xff]
    %v149 = vld [vmem:[#allocation5 + $0x240] sm:$0xff]
    %v150 = vld [vmem:[#allocation5 + $0x248] sm:$0xff]
    %v151 = vld [vmem:[#allocation5 + $0x250] sm:$0xff]
    %v152 = vld [vmem:[#allocation5 + $0x258] sm:$0xff]
    %v153 = vld [vmem:[#allocation5 + $0x260] sm:$0xff]
    %v154 = vld [vmem:[#allocation5 + $0x268] sm:$0xff]
    %v155 = vld [vmem:[#allocation5 + $0x270] sm:$0xff]
    %v156 = vld [vmem:[#allocation5 + $0x278] sm:$0xff]
    %v157 = vld [vmem:[#allocation5 + $0x280] sm:$0xff]
    %v158 = vld [vmem:[#allocation5 + $0x288] sm:$0xff]
    %v159 = vld [vmem:[#allocation5 + $0x290] sm:$0xff]
    %v160 = vld [vmem:[#allocation5 + $0x298] sm:$0xff]
    %v161 = vld [vmem:[#allocation5 + $0x2a0] sm:$0xff]
    %v162 = vld [vmem:[#allocation5 + $0x2a8] sm:$0xff]
    %v163 = vld [vmem:[#allocation5 + $0x2b0] sm:$0xff]
    %v164 = vld [vmem:[#allocation5 + $0x2b8] sm:$0xff]
    %v165 = vld [vmem:[#allocation5 + $0x2c0] sm:$0xff]
    %v166 = vld [vmem:[#allocation5 + $0x2c8] sm:$0xff]
    %v167 = vld [vmem:[#allocation5 + $0x2d0] sm:$0xff]
    %v168 = vld [vmem:[#allocation5 + $0x2d8] sm:$0xff]
    %v169 = vld [vmem:[#allocation5 + $0x2e0] sm:$0xff]
    %v170 = vld [vmem:[#allocation5 + $0x2e8] sm:$0xff]
    %v171 = vld [vmem:[#allocation5 + $0x2f0] sm:$0xff]
    %v172 = vld [vmem:[#allocation5 + $0x2f8] sm:$0xff]
    %v173 = vld [vmem:[#allocation5 + $0x300] sm:$0xff]
    %v174 = vld [vmem:[#allocation5 + $0x308] sm:$0xff]
    %v175 = vld [vmem:[#allocation5 + $0x310] sm:$0xff]
    %v176 = vld [vmem:[#allocation5 + $0x318] sm:$0xff]
    %v177 = vld [vmem:[#allocation5 + $0x320] sm:$0xff]
    %v178 = vld [vmem:[#allocation5 + $0x328] sm:$0xff]
    %v179 = vld [vmem:[#allocation5 + $0x330] sm:$0xff]
    %v180 = vld [vmem:[#allocation5 + $0x338] sm:$0xff]
    %v181 = vld [vmem:[#allocation5 + $0x340] sm:$0xff]
    %v182 = vld [vmem:[#allocation5 + $0x348] sm:$0xff]
    %v183 = vld [vmem:[#allocation5 + $0x350] sm:$0xff]
    %v184 = vld [vmem:[#allocation5 + $0x358] sm:$0xff]
    %v185 = vld [vmem:[#allocation5 + $0x360] sm:$0xff]
    %v186 = vld [vmem:[#allocation5 + $0x368] sm:$0xff]
    %v187 = vld [vmem:[#allocation5 + $0x370] sm:$0xff]
    %v188 = vld [vmem:[#allocation5 + $0x378] sm:$0xff]
    %v189 = vld [vmem:[#allocation5 + $0x380] sm:$0xff]
    %v190 = vld [vmem:[#allocation5 + $0x388] sm:$0xff]
    %v191 = vld [vmem:[#allocation5 + $0x390] sm:$0xff]
    %v192 = vld [vmem:[#allocation5 + $0x398] sm:$0xff]
    %v193 = vld [vmem:[#allocation5 + $0x3a0] sm:$0xff]
    %v194 = vld [vmem:[#allocation5 + $0x3a8] sm:$0xff]
    %v195 = vld [vmem:[#allocation5 + $0x3b0] sm:$0xff]
    %v196 = vld [vmem:[#allocation5 + $0x3b8] sm:$0xff]
    %v197 = vld [vmem:[#allocation5 + $0x3c0] sm:$0xff]
    %v198 = vld [vmem:[#allocation5 + $0x3c8] sm:$0xff]
    %v199 = vld [vmem:[#allocation5 + $0x3d0] sm:$0xff]
    %v200 = vld [vmem:[#allocation5 + $0x3d8] sm:$0xff]
    %v201 = vld [vmem:[#allocation5 + $0x3e0] sm:$0xff]
    %v202 = vld [vmem:[#allocation5 + $0x3e8] sm:$0xff]
    %v203 = vld [vmem:[#allocation5 + $0x3f0] sm:$0xff]
    %v204 = vld [vmem:[#allocation5 + $0x3f8] sm:$0xff]
    %v205 = vld [vmem:[#allocation5 + $0x400] sm:$0xff]
    %v206 = vld [vmem:[#allocation5 + $0x408] sm:$0xff]
    %v207 = vld [vmem:[#allocation5 + $0x410] sm:$0xff]
    %v208 = vld [vmem:[#allocation5 + $0x418] sm:$0xff]
    %v209 = vld [vmem:[#allocation5 + $0x420] sm:$0xff]
    %v210 = vld [vmem:[#allocation5 + $0x428] sm:$0xff]
    %v211 = vld [vmem:[#allocation5 + $0x430] sm:$0xff]
    %v212 = vld [vmem:[#allocation5 + $0x438] sm:$0xff]
    %v213 = vld [vmem:[#allocation5 + $0x440] sm:$0xff]
    %v214 = vld [vmem:[#allocation5 + $0x448] sm:$0xff]
    %v215 = vld [vmem:[#allocation5 + $0x450] sm:$0xff]
    %v216 = vld [vmem:[#allocation5 + $0x458] sm:$0xff]
    %v217 = vld [vmem:[#allocation5 + $0x460] sm:$0xff]
    %v218 = vld [vmem:[#allocation5 + $0x468] sm:$0xff]
    %v219 = vld [vmem:[#allocation5 + $0x470] sm:$0xff]
    %v220 = vld [vmem:[#allocation5 + $0x478] sm:$0xff]
    %v221 = vld [vmem:[#allocation5 + $0x480] sm:$0xff]
    %v222 = vld [vmem:[#allocation5 + $0x488] sm:$0xff]
    %v223 = vld [vmem:[#allocation5 + $0x490] sm:$0xff]
    %v224 = vld [vmem:[#allocation5 + $0x498] sm:$0xff]
    %v225 = vld [vmem:[#allocation5 + $0x4a0] sm:$0xff]
    %v226 = vld [vmem:[#allocation5 + $0x4a8] sm:$0xff]
    %v227 = vld [vmem:[#allocation5 + $0x4b0] sm:$0xff]
    %v228 = vld [vmem:[#allocation5 + $0x4b8] sm:$0xff]
    %v229 = vld [vmem:[#allocation5 + $0x4c0] sm:$0xff]
    %v230 = vld [vmem:[#allocation5 + $0x4c8] sm:$0xff]
    %v231 = vld [vmem:[#allocation5 + $0x4d0] sm:$0xff]
    %v232 = vld [vmem:[#allocation5 + $0x4d8] sm:$0xff]
    %v233 = vld [vmem:[#allocation5 + $0x4e0] sm:$0xff]
    %v234 = vld [vmem:[#allocation5 + $0x4e8] sm:$0xff]
    %v235 = vld [vmem:[#allocation5 + $0x4f0] sm:$0xff]
    %v236 = vld [vmem:[#allocation5 + $0x4f8] sm:$0xff]
    %v237 = vld [vmem:[#allocation5 + $0x500] sm:$0xff]
    %v238 = vld [vmem:[#allocation5 + $0x508] sm:$0xff]
    %v239 = vld [vmem:[#allocation5 + $0x510] sm:$0xff]
    %v240 = vld [vmem:[#allocation5 + $0x518] sm:$0xff]
    %v241 = vld [vmem:[#allocation5 + $0x520] sm:$0xff]
    %v242 = vld [vmem:[#allocation5 + $0x528] sm:$0xff]
    %v243 = vld [vmem:[#allocation5 + $0x530] sm:$0xff]
    %v244 = vld [vmem:[#allocation5 + $0x538] sm:$0xff]
    %v245 = vld [vmem:[#allocation5 + $0x540] sm:$0xff]
    %v246 = vld [vmem:[#allocation5 + $0x548] sm:$0xff]
    %v247 = vld [vmem:[#allocation5 + $0x550] sm:$0xff]
    %v248 = vld [vmem:[#allocation5 + $0x558] sm:$0xff]
    %v249 = vld [vmem:[#allocation5 + $0x560] sm:$0xff]
    %v250 = vld [vmem:[#allocation5 + $0x568] sm:$0xff]
    %v251 = vld [vmem:[#allocation5 + $0x570] sm:$0xff]
    %v252 = vld [vmem:[#allocation5 + $0x578] sm:$0xff]
    %v253 = vld [vmem:[#allocation5 + $0x580] sm:$0xff]
    %v254 = vld [vmem:[#allocation5 + $0x588] sm:$0xff]
    %v255 = vld [vmem:[#allocation5 + $0x590] sm:$0xff]
    %v256 = vld [vmem:[#allocation5 + $0x598] sm:$0xff]
    %v257 = vld [vmem:[#allocation5 + $0x5a0] sm:$0xff]
    %v258 = vld [vmem:[#allocation5 + $0x5a8] sm:$0xff]
    %v259 = vld [vmem:[#allocation5 + $0x5b0] sm:$0xff]
    %v260 = vld [vmem:[#allocation5 + $0x5b8] sm:$0xff]
    %v261 = vld [vmem:[#allocation5 + $0x5c0] sm:$0xff]
    %v262 = vld [vmem:[#allocation5 + $0x5c8] sm:$0xff]
    %v263 = vld [vmem:[#allocation5 + $0x5d0] sm:$0xff]
    %v264 = vld [vmem:[#allocation5 + $0x5d8] sm:$0xff]
    %v265 = vld [vmem:[#allocation5 + $0x5e0] sm:$0xff]
    %v266 = vld [vmem:[#allocation5 + $0x5e8] sm:$0xff]
    %v267 = vld [vmem:[#allocation5 + $0x5f0] sm:$0xff]
    %v268 = vld [vmem:[#allocation5 + $0x5f8] sm:$0xff]
    %v269 = vld [vmem:[%s2] sm:$0xf]
    %v271 = vlaneseq
    %v272 = vshrl.u32 %v271, 7
    %v273 = vsub.s32 0, %v272
    %v274 = vrot.slane %v269, %v273
    %v275 = vlaneseq
    %v276 = vshrl.u32 %v275, 7
    %v277 = vsub.s32 1, %v276
    %v278 = vrot.slane %v269, %v277
    %v279 = vlaneseq
    %v280 = vshrl.u32 %v279, 7
    %v281 = vsub.s32 2, %v280
    %v282 = vrot.slane %v269, %v281
    %v283 = vlaneseq
    %v284 = vshrl.u32 %v283, 7
    %v285 = vsub.s32 3, %v284
    %v286 = vrot.slane %v269, %v285
    %v483 = vunpack.c.l.b16 %v77
    %v484 = vunpack.c.h.b16 %v77
    %v485 = vunpack.c.l.b16 %v78
    %v486 = vunpack.c.h.b16 %v78
    %v487 = vunpack.c.l.b16 %v79
    %v488 = vunpack.c.h.b16 %v79
    %v489 = vunpack.c.l.b16 %v80
    %v490 = vunpack.c.h.b16 %v80
    %v491 = vunpack.c.l.b16 %v81
    %v492 = vunpack.c.h.b16 %v81
    %v493 = vunpack.c.l.b16 %v82
    %v494 = vunpack.c.h.b16 %v82
    %v495 = vunpack.c.l.b16 %v83
    %v496 = vunpack.c.h.b16 %v83
    %v497 = vunpack.c.l.b16 %v84
    %v498 = vunpack.c.h.b16 %v84
    %v499 = vunpack.c.l.b16 %v85
    %v500 = vunpack.c.h.b16 %v85
    %v501 = vunpack.c.l.b16 %v86
    %v502 = vunpack.c.h.b16 %v86
    %v503 = vunpack.c.l.b16 %v87
    %v504 = vunpack.c.h.b16 %v87
    %v505 = vunpack.c.l.b16 %v88
    %v506 = vunpack.c.h.b16 %v88
    %v507 = vunpack.c.l.b16 %v89
    %v508 = vunpack.c.h.b16 %v89
    %v509 = vunpack.c.l.b16 %v90
    %v510 = vunpack.c.h.b16 %v90
    %v511 = vunpack.c.l.b16 %v91
    %v512 = vunpack.c.h.b16 %v91
    %v513 = vunpack.c.l.b16 %v92
    %v514 = vunpack.c.h.b16 %v92
    %v515 = vunpack.c.l.b16 %v93
    %v516 = vunpack.c.h.b16 %v93
    %v517 = vunpack.c.l.b16 %v94
    %v518 = vunpack.c.h.b16 %v94
    %v519 = vunpack.c.l.b16 %v95
    %v520 = vunpack.c.h.b16 %v95
    %v521 = vunpack.c.l.b16 %v96
    %v522 = vunpack.c.h.b16 %v96
    %v523 = vunpack.c.l.b16 %v97
    %v524 = vunpack.c.h.b16 %v97
    %v525 = vunpack.c.l.b16 %v98
    %v526 = vunpack.c.h.b16 %v98
    %v527 = vunpack.c.l.b16 %v99
    %v528 = vunpack.c.h.b16 %v99
    %v529 = vunpack.c.l.b16 %v100
    %v530 = vunpack.c.h.b16 %v100
    %v531 = vunpack.c.l.b16 %v101
    %v532 = vunpack.c.h.b16 %v101
    %v533 = vunpack.c.l.b16 %v102
    %v534 = vunpack.c.h.b16 %v102
    %v535 = vunpack.c.l.b16 %v103
    %v536 = vunpack.c.h.b16 %v103
    %v537 = vunpack.c.l.b16 %v104
    %v538 = vunpack.c.h.b16 %v104
    %v539 = vunpack.c.l.b16 %v105
    %v540 = vunpack.c.h.b16 %v105
    %v541 = vunpack.c.l.b16 %v106
    %v542 = vunpack.c.h.b16 %v106
    %v543 = vunpack.c.l.b16 %v107
    %v544 = vunpack.c.h.b16 %v107
    %v545 = vunpack.c.l.b16 %v108
    %v546 = vunpack.c.h.b16 %v108
    %v547 = vunpack.c.l.b16 %v109
    %v548 = vunpack.c.h.b16 %v109
    %v549 = vunpack.c.l.b16 %v110
    %v550 = vunpack.c.h.b16 %v110
    %v551 = vunpack.c.l.b16 %v111
    %v552 = vunpack.c.h.b16 %v111
    %v553 = vunpack.c.l.b16 %v112
    %v554 = vunpack.c.h.b16 %v112
    %v555 = vunpack.c.l.b16 %v113
    %v556 = vunpack.c.h.b16 %v113
    %v557 = vunpack.c.l.b16 %v114
    %v558 = vunpack.c.h.b16 %v114
    %v559 = vunpack.c.l.b16 %v115
    %v560 = vunpack.c.h.b16 %v115
    %v561 = vunpack.c.l.b16 %v116
    %v562 = vunpack.c.h.b16 %v116
    %v563 = vunpack.c.l.b16 %v117
    %v564 = vunpack.c.h.b16 %v117
    %v565 = vunpack.c.l.b16 %v118
    %v566 = vunpack.c.h.b16 %v118
    %v567 = vunpack.c.l.b16 %v119
    %v568 = vunpack.c.h.b16 %v119
    %v569 = vunpack.c.l.b16 %v120
    %v570 = vunpack.c.h.b16 %v120
    %v571 = vunpack.c.l.b16 %v121
    %v572 = vunpack.c.h.b16 %v121
    %v573 = vunpack.c.l.b16 %v122
    %v574 = vunpack.c.h.b16 %v122
    %v575 = vunpack.c.l.b16 %v123
    %v576 = vunpack.c.h.b16 %v123
    %v577 = vunpack.c.l.b16 %v124
    %v578 = vunpack.c.h.b16 %v124
    %v579 = vunpack.c.l.b16 %v125
    %v580 = vunpack.c.h.b16 %v125
    %v581 = vunpack.c.l.b16 %v126
    %v582 = vunpack.c.h.b16 %v126
    %v583 = vunpack.c.l.b16 %v127
    %v584 = vunpack.c.h.b16 %v127
    %v585 = vunpack.c.l.b16 %v128
    %v586 = vunpack.c.h.b16 %v128
    %v587 = vunpack.c.l.b16 %v129
    %v588 = vunpack.c.h.b16 %v129
    %v589 = vunpack.c.l.b16 %v130
    %v590 = vunpack.c.h.b16 %v130
    %v591 = vunpack.c.l.b16 %v131
    %v592 = vunpack.c.h.b16 %v131
    %v593 = vunpack.c.l.b16 %v132
    %v594 = vunpack.c.h.b16 %v132
    %v595 = vunpack.c.l.b16 %v133
    %v596 = vunpack.c.h.b16 %v133
    %v597 = vunpack.c.l.b16 %v134
    %v598 = vunpack.c.h.b16 %v134
    %v599 = vunpack.c.l.b16 %v135
    %v600 = vunpack.c.h.b16 %v135
    %v601 = vunpack.c.l.b16 %v136
    %v602 = vunpack.c.h.b16 %v136
    %v603 = vunpack.c.l.b16 %v137
    %v604 = vunpack.c.h.b16 %v137
    %v605 = vunpack.c.l.b16 %v138
    %v606 = vunpack.c.h.b16 %v138
    %v607 = vunpack.c.l.b16 %v139
    %v608 = vunpack.c.h.b16 %v139
    %v609 = vunpack.c.l.b16 %v140
    %v610 = vunpack.c.h.b16 %v140
    %v611 = vunpack.c.l.b16 %v141
    %v612 = vunpack.c.h.b16 %v141
    %v613 = vunpack.c.l.b16 %v142
    %v614 = vunpack.c.h.b16 %v142
    %v615 = vunpack.c.l.b16 %v143
    %v616 = vunpack.c.h.b16 %v143
    %v617 = vunpack.c.l.b16 %v144
    %v618 = vunpack.c.h.b16 %v144
    %v619 = vunpack.c.l.b16 %v145
    %v620 = vunpack.c.h.b16 %v145
    %v621 = vunpack.c.l.b16 %v146
    %v622 = vunpack.c.h.b16 %v146
    %v623 = vunpack.c.l.b16 %v147
    %v624 = vunpack.c.h.b16 %v147
    %v625 = vunpack.c.l.b16 %v148
    %v626 = vunpack.c.h.b16 %v148
    %v627 = vunpack.c.l.b16 %v149
    %v628 = vunpack.c.h.b16 %v149
    %v629 = vunpack.c.l.b16 %v150
    %v630 = vunpack.c.h.b16 %v150
    %v631 = vunpack.c.l.b16 %v151
    %v632 = vunpack.c.h.b16 %v151
    %v633 = vunpack.c.l.b16 %v152
    %v634 = vunpack.c.h.b16 %v152
    %v635 = vunpack.c.l.b16 %v153
    %v636 = vunpack.c.h.b16 %v153
    %v637 = vunpack.c.l.b16 %v154
    %v638 = vunpack.c.h.b16 %v154
    %v639 = vunpack.c.l.b16 %v155
    %v640 = vunpack.c.h.b16 %v155
    %v641 = vunpack.c.l.b16 %v156
    %v642 = vunpack.c.h.b16 %v156
    %v643 = vunpack.c.l.b16 %v157
    %v644 = vunpack.c.h.b16 %v157
    %v645 = vunpack.c.l.b16 %v158
    %v646 = vunpack.c.h.b16 %v158
    %v647 = vunpack.c.l.b16 %v159
    %v648 = vunpack.c.h.b16 %v159
    %v649 = vunpack.c.l.b16 %v160
    %v650 = vunpack.c.h.b16 %v160
    %v651 = vunpack.c.l.b16 %v161
    %v652 = vunpack.c.h.b16 %v161
    %v653 = vunpack.c.l.b16 %v162
    %v654 = vunpack.c.h.b16 %v162
    %v655 = vunpack.c.l.b16 %v163
    %v656 = vunpack.c.h.b16 %v163
    %v657 = vunpack.c.l.b16 %v164
    %v658 = vunpack.c.h.b16 %v164
    %v659 = vunpack.c.l.b16 %v165
    %v660 = vunpack.c.h.b16 %v165
    %v661 = vunpack.c.l.b16 %v166
    %v662 = vunpack.c.h.b16 %v166
    %v663 = vunpack.c.l.b16 %v167
    %v664 = vunpack.c.h.b16 %v167
    %v665 = vunpack.c.l.b16 %v168
    %v666 = vunpack.c.h.b16 %v168
    %v667 = vunpack.c.l.b16 %v169
    %v668 = vunpack.c.h.b16 %v169
    %v669 = vunpack.c.l.b16 %v170
    %v670 = vunpack.c.h.b16 %v170
    %v671 = vunpack.c.l.b16 %v171
    %v672 = vunpack.c.h.b16 %v171
    %v673 = vunpack.c.l.b16 %v172
    %v674 = vunpack.c.h.b16 %v172
    %v675 = vunpack.c.l.b16 %v173
    %v676 = vunpack.c.h.b16 %v173
    %v677 = vunpack.c.l.b16 %v174
    %v678 = vunpack.c.h.b16 %v174
    %v679 = vunpack.c.l.b16 %v175
    %v680 = vunpack.c.h.b16 %v175
    %v681 = vunpack.c.l.b16 %v176
    %v682 = vunpack.c.h.b16 %v176
    %v683 = vunpack.c.l.b16 %v177
    %v684 = vunpack.c.h.b16 %v177
    %v685 = vunpack.c.l.b16 %v178
    %v686 = vunpack.c.h.b16 %v178
    %v687 = vunpack.c.l.b16 %v179
    %v688 = vunpack.c.h.b16 %v179
    %v689 = vunpack.c.l.b16 %v180
    %v690 = vunpack.c.h.b16 %v180
    %v691 = vunpack.c.l.b16 %v181
    %v692 = vunpack.c.h.b16 %v181
    %v693 = vunpack.c.l.b16 %v182
    %v694 = vunpack.c.h.b16 %v182
    %v695 = vunpack.c.l.b16 %v183
    %v696 = vunpack.c.h.b16 %v183
    %v697 = vunpack.c.l.b16 %v184
    %v698 = vunpack.c.h.b16 %v184
    %v699 = vunpack.c.l.b16 %v185
    %v700 = vunpack.c.h.b16 %v185
    %v701 = vunpack.c.l.b16 %v186
    %v702 = vunpack.c.h.b16 %v186
    %v703 = vunpack.c.l.b16 %v187
    %v704 = vunpack.c.h.b16 %v187
    %v705 = vunpack.c.l.b16 %v188
    %v706 = vunpack.c.h.b16 %v188
    %v707 = vunpack.c.l.b16 %v189
    %v708 = vunpack.c.h.b16 %v189
    %v709 = vunpack.c.l.b16 %v190
    %v710 = vunpack.c.h.b16 %v190
    %v711 = vunpack.c.l.b16 %v191
    %v712 = vunpack.c.h.b16 %v191
    %v713 = vunpack.c.l.b16 %v192
    %v714 = vunpack.c.h.b16 %v192
    %v715 = vunpack.c.l.b16 %v193
    %v716 = vunpack.c.h.b16 %v193
    %v717 = vunpack.c.l.b16 %v194
    %v718 = vunpack.c.h.b16 %v194
    %v719 = vunpack.c.l.b16 %v195
    %v720 = vunpack.c.h.b16 %v195
    %v721 = vunpack.c.l.b16 %v196
    %v722 = vunpack.c.h.b16 %v196
    %v723 = vunpack.c.l.b16 %v197
    %v724 = vunpack.c.h.b16 %v197
    %v725 = vunpack.c.l.b16 %v198
    %v726 = vunpack.c.h.b16 %v198
    %v727 = vunpack.c.l.b16 %v199
    %v728 = vunpack.c.h.b16 %v199
    %v729 = vunpack.c.l.b16 %v200
    %v730 = vunpack.c.h.b16 %v200
    %v731 = vunpack.c.l.b16 %v201
    %v732 = vunpack.c.h.b16 %v201
    %v733 = vunpack.c.l.b16 %v202
    %v734 = vunpack.c.h.b16 %v202
    %v735 = vunpack.c.l.b16 %v203
    %v736 = vunpack.c.h.b16 %v203
    %v737 = vunpack.c.l.b16 %v204
    %v738 = vunpack.c.h.b16 %v204
    %v739 = vunpack.c.l.b16 %v205
    %v740 = vunpack.c.h.b16 %v205
    %v741 = vunpack.c.l.b16 %v206
    %v742 = vunpack.c.h.b16 %v206
    %v743 = vunpack.c.l.b16 %v207
    %v744 = vunpack.c.h.b16 %v207
    %v745 = vunpack.c.l.b16 %v208
    %v746 = vunpack.c.h.b16 %v208
    %v747 = vunpack.c.l.b16 %v209
    %v748 = vunpack.c.h.b16 %v209
    %v749 = vunpack.c.l.b16 %v210
    %v750 = vunpack.c.h.b16 %v210
    %v751 = vunpack.c.l.b16 %v211
    %v752 = vunpack.c.h.b16 %v211
    %v753 = vunpack.c.l.b16 %v212
    %v754 = vunpack.c.h.b16 %v212
    %v755 = vunpack.c.l.b16 %v213
    %v756 = vunpack.c.h.b16 %v213
    %v757 = vunpack.c.l.b16 %v214
    %v758 = vunpack.c.h.b16 %v214
    %v759 = vunpack.c.l.b16 %v215
    %v760 = vunpack.c.h.b16 %v215
    %v761 = vunpack.c.l.b16 %v216
    %v762 = vunpack.c.h.b16 %v216
    %v763 = vunpack.c.l.b16 %v217
    %v764 = vunpack.c.h.b16 %v217
    %v765 = vunpack.c.l.b16 %v218
    %v766 = vunpack.c.h.b16 %v218
    %v767 = vunpack.c.l.b16 %v219
    %v768 = vunpack.c.h.b16 %v219
    %v769 = vunpack.c.l.b16 %v220
    %v770 = vunpack.c.h.b16 %v220
    %v771 = vunpack.c.l.b16 %v221
    %v772 = vunpack.c.h.b16 %v221
    %v773 = vunpack.c.l.b16 %v222
    %v774 = vunpack.c.h.b16 %v222
    %v775 = vunpack.c.l.b16 %v223
    %v776 = vunpack.c.h.b16 %v223
    %v777 = vunpack.c.l.b16 %v224
    %v778 = vunpack.c.h.b16 %v224
    %v779 = vunpack.c.l.b16 %v225
    %v780 = vunpack.c.h.b16 %v225
    %v781 = vunpack.c.l.b16 %v226
    %v782 = vunpack.c.h.b16 %v226
    %v783 = vunpack.c.l.b16 %v227
    %v784 = vunpack.c.h.b16 %v227
    %v785 = vunpack.c.l.b16 %v228
    %v786 = vunpack.c.h.b16 %v228
    %v787 = vunpack.c.l.b16 %v229
    %v788 = vunpack.c.h.b16 %v229
    %v789 = vunpack.c.l.b16 %v230
    %v790 = vunpack.c.h.b16 %v230
    %v791 = vunpack.c.l.b16 %v231
    %v792 = vunpack.c.h.b16 %v231
    %v793 = vunpack.c.l.b16 %v232
    %v794 = vunpack.c.h.b16 %v232
    %v795 = vunpack.c.l.b16 %v233
    %v796 = vunpack.c.h.b16 %v233
    %v797 = vunpack.c.l.b16 %v234
    %v798 = vunpack.c.h.b16 %v234
    %v799 = vunpack.c.l.b16 %v235
    %v800 = vunpack.c.h.b16 %v235
    %v801 = vunpack.c.l.b16 %v236
    %v802 = vunpack.c.h.b16 %v236
    %v803 = vunpack.c.l.b16 %v237
    %v804 = vunpack.c.h.b16 %v237
    %v805 = vunpack.c.l.b16 %v238
    %v806 = vunpack.c.h.b16 %v238
    %v807 = vunpack.c.l.b16 %v239
    %v808 = vunpack.c.h.b16 %v239
    %v809 = vunpack.c.l.b16 %v240
    %v810 = vunpack.c.h.b16 %v240
    %v811 = vunpack.c.l.b16 %v241
    %v812 = vunpack.c.h.b16 %v241
    %v813 = vunpack.c.l.b16 %v242
    %v814 = vunpack.c.h.b16 %v242
    %v815 = vunpack.c.l.b16 %v243
    %v816 = vunpack.c.h.b16 %v243
    %v817 = vunpack.c.l.b16 %v244
    %v818 = vunpack.c.h.b16 %v244
    %v819 = vunpack.c.l.b16 %v245
    %v820 = vunpack.c.h.b16 %v245
    %v821 = vunpack.c.l.b16 %v246
    %v822 = vunpack.c.h.b16 %v246
    %v823 = vunpack.c.l.b16 %v247
    %v824 = vunpack.c.h.b16 %v247
    %v825 = vunpack.c.l.b16 %v248
    %v826 = vunpack.c.h.b16 %v248
    %v827 = vunpack.c.l.b16 %v249
    %v828 = vunpack.c.h.b16 %v249
    %v829 = vunpack.c.l.b16 %v250
    %v830 = vunpack.c.h.b16 %v250
    %v831 = vunpack.c.l.b16 %v251
    %v832 = vunpack.c.h.b16 %v251
    %v833 = vunpack.c.l.b16 %v252
    %v834 = vunpack.c.h.b16 %v252
    %v835 = vunpack.c.l.b16 %v253
    %v836 = vunpack.c.h.b16 %v253
    %v837 = vunpack.c.l.b16 %v254
    %v838 = vunpack.c.h.b16 %v254
    %v839 = vunpack.c.l.b16 %v255
    %v840 = vunpack.c.h.b16 %v255
    %v841 = vunpack.c.l.b16 %v256
    %v842 = vunpack.c.h.b16 %v256
    %v843 = vunpack.c.l.b16 %v257
    %v844 = vunpack.c.h.b16 %v257
    %v845 = vunpack.c.l.b16 %v258
    %v846 = vunpack.c.h.b16 %v258
    %v847 = vunpack.c.l.b16 %v259
    %v848 = vunpack.c.h.b16 %v259
    %v849 = vunpack.c.l.b16 %v260
    %v850 = vunpack.c.h.b16 %v260
    %v851 = vunpack.c.l.b16 %v261
    %v852 = vunpack.c.h.b16 %v261
    %v853 = vunpack.c.l.b16 %v262
    %v854 = vunpack.c.h.b16 %v262
    %v855 = vunpack.c.l.b16 %v263
    %v856 = vunpack.c.h.b16 %v263
    %v857 = vunpack.c.l.b16 %v264
    %v858 = vunpack.c.h.b16 %v264
    %v859 = vunpack.c.l.b16 %v265
    %v860 = vunpack.c.h.b16 %v265
    %v861 = vunpack.c.l.b16 %v266
    %v862 = vunpack.c.h.b16 %v266
    %v863 = vunpack.c.l.b16 %v267
    %v864 = vunpack.c.h.b16 %v267
    %v865 = vunpack.c.l.b16 %v268
    %v866 = vunpack.c.h.b16 %v268
    %v867 = vpack.c.b16 %v487, %v483
    %v868 = vpack.c.b16 %v488, %v484
    %v869 = vpack.c.b16 %v489, %v485
    %v870 = vpack.c.b16 %v490, %v486
    %v871 = vpack.c.b16 %v495, %v491
    %v872 = vpack.c.b16 %v496, %v492
    %v873 = vpack.c.b16 %v497, %v493
    %v874 = vpack.c.b16 %v498, %v494
    %v875 = vpack.c.b16 %v503, %v499
    %v876 = vpack.c.b16 %v504, %v500
    %v877 = vpack.c.b16 %v505, %v501
    %v878 = vpack.c.b16 %v506, %v502
    %v879 = vpack.c.b16 %v511, %v507
    %v880 = vpack.c.b16 %v512, %v508
    %v881 = vpack.c.b16 %v513, %v509
    %v882 = vpack.c.b16 %v514, %v510
    %v883 = vpack.c.b16 %v519, %v515
    %v884 = vpack.c.b16 %v520, %v516
    %v885 = vpack.c.b16 %v521, %v517
    %v886 = vpack.c.b16 %v522, %v518
    %v887 = vpack.c.b16 %v527, %v523
    %v888 = vpack.c.b16 %v528, %v524
    %v889 = vpack.c.b16 %v529, %v525
    %v890 = vpack.c.b16 %v530, %v526
    %v891 = vpack.c.b16 %v535, %v531
    %v892 = vpack.c.b16 %v536, %v532
    %v893 = vpack.c.b16 %v537, %v533
    %v894 = vpack.c.b16 %v538, %v534
    %v895 = vpack.c.b16 %v543, %v539
    %v896 = vpack.c.b16 %v544, %v540
    %v897 = vpack.c.b16 %v545, %v541
    %v898 = vpack.c.b16 %v546, %v542
    %v899 = vpack.c.b16 %v551, %v547
    %v900 = vpack.c.b16 %v552, %v548
    %v901 = vpack.c.b16 %v553, %v549
    %v902 = vpack.c.b16 %v554, %v550
    %v903 = vpack.c.b16 %v559, %v555
    %v904 = vpack.c.b16 %v560, %v556
    %v905 = vpack.c.b16 %v561, %v557
    %v906 = vpack.c.b16 %v562, %v558
    %v907 = vpack.c.b16 %v567, %v563
    %v908 = vpack.c.b16 %v568, %v564
    %v909 = vpack.c.b16 %v569, %v565
    %v910 = vpack.c.b16 %v570, %v566
    %v911 = vpack.c.b16 %v575, %v571
    %v912 = vpack.c.b16 %v576, %v572
    %v913 = vpack.c.b16 %v577, %v573
    %v914 = vpack.c.b16 %v578, %v574
    %v915 = vpack.c.b16 %v583, %v579
    %v916 = vpack.c.b16 %v584, %v580
    %v917 = vpack.c.b16 %v585, %v581
    %v918 = vpack.c.b16 %v586, %v582
    %v919 = vpack.c.b16 %v591, %v587
    %v920 = vpack.c.b16 %v592, %v588
    %v921 = vpack.c.b16 %v593, %v589
    %v922 = vpack.c.b16 %v594, %v590
    %v923 = vpack.c.b16 %v599, %v595
    %v924 = vpack.c.b16 %v600, %v596
    %v925 = vpack.c.b16 %v601, %v597
    %v926 = vpack.c.b16 %v602, %v598
    %v927 = vpack.c.b16 %v607, %v603
    %v928 = vpack.c.b16 %v608, %v604
    %v929 = vpack.c.b16 %v609, %v605
    %v930 = vpack.c.b16 %v610, %v606
    %v931 = vpack.c.b16 %v615, %v611
    %v932 = vpack.c.b16 %v616, %v612
    %v933 = vpack.c.b16 %v617, %v613
    %v934 = vpack.c.b16 %v618, %v614
    %v935 = vpack.c.b16 %v623, %v619
    %v936 = vpack.c.b16 %v624, %v620
    %v937 = vpack.c.b16 %v625, %v621
    %v938 = vpack.c.b16 %v626, %v622
    %v939 = vpack.c.b16 %v631, %v627
    %v940 = vpack.c.b16 %v632, %v628
    %v941 = vpack.c.b16 %v633, %v629
    %v942 = vpack.c.b16 %v634, %v630
    %v943 = vpack.c.b16 %v639, %v635
    %v944 = vpack.c.b16 %v640, %v636
    %v945 = vpack.c.b16 %v641, %v637
    %v946 = vpack.c.b16 %v642, %v638
    %v947 = vpack.c.b16 %v647, %v643
    %v948 = vpack.c.b16 %v648, %v644
    %v949 = vpack.c.b16 %v649, %v645
    %v950 = vpack.c.b16 %v650, %v646
    %v951 = vpack.c.b16 %v655, %v651
    %v952 = vpack.c.b16 %v656, %v652
    %v953 = vpack.c.b16 %v657, %v653
    %v954 = vpack.c.b16 %v658, %v654
    %v955 = vpack.c.b16 %v663, %v659
    %v956 = vpack.c.b16 %v664, %v660
    %v957 = vpack.c.b16 %v665, %v661
    %v958 = vpack.c.b16 %v666, %v662
    %v959 = vpack.c.b16 %v671, %v667
    %v960 = vpack.c.b16 %v672, %v668
    %v961 = vpack.c.b16 %v673, %v669
    %v962 = vpack.c.b16 %v674, %v670
    %v963 = vpack.c.b16 %v679, %v675
    %v964 = vpack.c.b16 %v680, %v676
    %v965 = vpack.c.b16 %v681, %v677
    %v966 = vpack.c.b16 %v682, %v678
    %v967 = vpack.c.b16 %v687, %v683
    %v968 = vpack.c.b16 %v688, %v684
    %v969 = vpack.c.b16 %v689, %v685
    %v970 = vpack.c.b16 %v690, %v686
    %v971 = vpack.c.b16 %v695, %v691
    %v972 = vpack.c.b16 %v696, %v692
    %v973 = vpack.c.b16 %v697, %v693
    %v974 = vpack.c.b16 %v698, %v694
    %v975 = vpack.c.b16 %v703, %v699
    %v976 = vpack.c.b16 %v704, %v700
    %v977 = vpack.c.b16 %v705, %v701
    %v978 = vpack.c.b16 %v706, %v702
    %v979 = vpack.c.b16 %v711, %v707
    %v980 = vpack.c.b16 %v712, %v708
    %v981 = vpack.c.b16 %v713, %v709
    %v982 = vpack.c.b16 %v714, %v710
    %v983 = vpack.c.b16 %v719, %v715
    %v984 = vpack.c.b16 %v720, %v716
    %v985 = vpack.c.b16 %v721, %v717
    %v986 = vpack.c.b16 %v722, %v718
    %v987 = vpack.c.b16 %v727, %v723
    %v988 = vpack.c.b16 %v728, %v724
    %v989 = vpack.c.b16 %v729, %v725
    %v990 = vpack.c.b16 %v730, %v726
    %v991 = vpack.c.b16 %v735, %v731
    %v992 = vpack.c.b16 %v736, %v732
    %v993 = vpack.c.b16 %v737, %v733
    %v994 = vpack.c.b16 %v738, %v734
    %v995 = vpack.c.b16 %v743, %v739
    %v996 = vpack.c.b16 %v744, %v740
    %v997 = vpack.c.b16 %v745, %v741
    %v998 = vpack.c.b16 %v746, %v742
    %v999 = vpack.c.b16 %v751, %v747
    %v1000 = vpack.c.b16 %v752, %v748
    %v1001 = vpack.c.b16 %v753, %v749
    %v1002 = vpack.c.b16 %v754, %v750
    %v1003 = vpack.c.b16 %v759, %v755
    %v1004 = vpack.c.b16 %v760, %v756
    %v1005 = vpack.c.b16 %v761, %v757
    %v1006 = vpack.c.b16 %v762, %v758
    %v1007 = vpack.c.b16 %v767, %v763
    %v1008 = vpack.c.b16 %v768, %v764
    %v1009 = vpack.c.b16 %v769, %v765
    %v1010 = vpack.c.b16 %v770, %v766
    %v1011 = vpack.c.b16 %v775, %v771
    %v1012 = vpack.c.b16 %v776, %v772
    %v1013 = vpack.c.b16 %v777, %v773
    %v1014 = vpack.c.b16 %v778, %v774
    %v1015 = vpack.c.b16 %v783, %v779
    %v1016 = vpack.c.b16 %v784, %v780
    %v1017 = vpack.c.b16 %v785, %v781
    %v1018 = vpack.c.b16 %v786, %v782
    %v1019 = vpack.c.b16 %v791, %v787
    %v1020 = vpack.c.b16 %v792, %v788
    %v1021 = vpack.c.b16 %v793, %v789
    %v1022 = vpack.c.b16 %v794, %v790
    %v1023 = vpack.c.b16 %v799, %v795
    %v1024 = vpack.c.b16 %v800, %v796
    %v1025 = vpack.c.b16 %v801, %v797
    %v1026 = vpack.c.b16 %v802, %v798
    %v1027 = vpack.c.b16 %v807, %v803
    %v1028 = vpack.c.b16 %v808, %v804
    %v1029 = vpack.c.b16 %v809, %v805
    %v1030 = vpack.c.b16 %v810, %v806
    %v1031 = vpack.c.b16 %v815, %v811
    %v1032 = vpack.c.b16 %v816, %v812
    %v1033 = vpack.c.b16 %v817, %v813
    %v1034 = vpack.c.b16 %v818, %v814
    %v1035 = vpack.c.b16 %v823, %v819
    %v1036 = vpack.c.b16 %v824, %v820
    %v1037 = vpack.c.b16 %v825, %v821
    %v1038 = vpack.c.b16 %v826, %v822
    %v1039 = vpack.c.b16 %v831, %v827
    %v1040 = vpack.c.b16 %v832, %v828
    %v1041 = vpack.c.b16 %v833, %v829
    %v1042 = vpack.c.b16 %v834, %v830
    %v1043 = vpack.c.b16 %v839, %v835
    %v1044 = vpack.c.b16 %v840, %v836
    %v1045 = vpack.c.b16 %v841, %v837
    %v1046 = vpack.c.b16 %v842, %v838
    %v1047 = vpack.c.b16 %v847, %v843
    %v1048 = vpack.c.b16 %v848, %v844
    %v1049 = vpack.c.b16 %v849, %v845
    %v1050 = vpack.c.b16 %v850, %v846
    %v1051 = vpack.c.b16 %v855, %v851
    %v1052 = vpack.c.b16 %v856, %v852
    %v1053 = vpack.c.b16 %v857, %v853
    %v1054 = vpack.c.b16 %v858, %v854
    %v1055 = vpack.c.b16 %v863, %v859
    %v1056 = vpack.c.b16 %v864, %v860
    %v1057 = vpack.c.b16 %v865, %v861
    %v1058 = vpack.c.b16 %v866, %v862
    %1251 = vmatprep.subr.bf16.mxu0 %v868
    %1252 = vmatpush1.bf16.msra.mxu0 %v867
    %1253 = vmatprep.subr.bf16.mxu0 %v872
    %1254 = vmatpush1.bf16.msra.mxu0 %v871
    %1255 = vmatprep.subr.bf16.mxu0 %v876
    %1256 = vmatpush1.bf16.msra.mxu0 %v875
    %1257 = vmatprep.subr.bf16.mxu0 %v880
    %1258 = vmatpush1.bf16.msra.mxu0 %v879
    %1259 = vmatprep.subr.bf16.mxu0 %v884
    %1260 = vmatpush1.bf16.msra.mxu0 %v883
    %1261 = vmatprep.subr.bf16.mxu0 %v888
    %1262 = vmatpush1.bf16.msra.mxu0 %v887
    %1263 = vmatprep.subr.bf16.mxu0 %v892
    %1264 = vmatpush1.bf16.msra.mxu0 %v891
    %1265 = vmatprep.subr.bf16.mxu0 %v896
    %1266 = vmatpush1.bf16.msra.mxu0 %v895
    %1267 = vmatprep.subr.bf16.mxu0 %v900
    %1268 = vmatpush1.bf16.msra.mxu0 %v899
    %1269 = vmatprep.subr.bf16.mxu0 %v904
    %1270 = vmatpush1.bf16.msra.mxu0 %v903
    %1271 = vmatprep.subr.bf16.mxu0 %v908
    %1272 = vmatpush1.bf16.msra.mxu0 %v907
    %1273 = vmatprep.subr.bf16.mxu0 %v912
    %1274 = vmatpush1.bf16.msra.mxu0 %v911
    %1275 = vmatprep.subr.bf16.mxu0 %v916
    %1276 = vmatpush1.bf16.msra.mxu0 %v915
    %1277 = vmatprep.subr.bf16.mxu0 %v920
    %1278 = vmatpush1.bf16.msra.mxu0 %v919
    %1279 = vmatprep.subr.bf16.mxu0 %v924
    %1280 = vmatpush1.bf16.msra.mxu0 %v923
    %1281 = vmatprep.subr.bf16.mxu0 %v928
    %1282 = vmatpush1.bf16.msra.mxu0 %v927
    %1283 = vmatprep.mubr.bf16.mxu0 %v72
    %1284 = vmatmul.mubr.bf16.gmra.mrb[0].mxu0 %v71
    %v1285 = vpop.f32.mrb[0].mxu0
    %v1286 = vadd.f32 %v274, %v1285
    %v1287 = vpop.f32.mrb[0].mxu0
    %v1288 = vadd.f32 %v278, %v1287
    %v1289 = vpop.f32.mrb[0].mxu0
    %v1290 = vadd.f32 %v274, %v1289
    %v1291 = vpop.f32.mrb[0].mxu0
    %v1292 = vadd.f32 %v278, %v1291
    %1293 = vdwg.mxu0
    %1294 = vmatprep.subr.bf16.mxu0 %v932
    %1295 = vmatpush1.bf16.msra.mxu0 %v931
    %1296 = vmatprep.subr.bf16.mxu0 %v936
    %1297 = vmatpush1.bf16.msra.mxu0 %v935
    %1298 = vmatprep.subr.bf16.mxu0 %v940
    %1299 = vmatpush1.bf16.msra.mxu0 %v939
    %1300 = vmatprep.subr.bf16.mxu0 %v944
    %1301 = vmatpush1.bf16.msra.mxu0 %v943
    %1302 = vmatprep.subr.bf16.mxu0 %v948
    %1303 = vmatpush1.bf16.msra.mxu0 %v947
    %1304 = vmatprep.subr.bf16.mxu0 %v952
    %1305 = vmatpush1.bf16.msra.mxu0 %v951
    %1306 = vmatprep.subr.bf16.mxu0 %v956
    %1307 = vmatpush1.bf16.msra.mxu0 %v955
    %1308 = vmatprep.subr.bf16.mxu0 %v960
    %1309 = vmatpush1.bf16.msra.mxu0 %v959
    %1310 = vmatprep.subr.bf16.mxu0 %v964
    %1311 = vmatpush1.bf16.msra.mxu0 %v963
    %1312 = vmatprep.subr.bf16.mxu0 %v968
    %1313 = vmatpush1.bf16.msra.mxu0 %v967
    %1314 = vmatprep.subr.bf16.mxu0 %v972
    %1315 = vmatpush1.bf16.msra.mxu0 %v971
    %1316 = vmatprep.subr.bf16.mxu0 %v976
    %1317 = vmatpush1.bf16.msra.mxu0 %v975
    %1318 = vmatprep.subr.bf16.mxu0 %v980
    %1319 = vmatpush1.bf16.msra.mxu0 %v979
    %1320 = vmatprep.subr.bf16.mxu0 %v984
    %1321 = vmatpush1.bf16.msra.mxu0 %v983
    %1322 = vmatprep.subr.bf16.mxu0 %v988
    %1323 = vmatpush1.bf16.msra.mxu0 %v987
    %1324 = vmatprep.subr.bf16.mxu0 %v992
    %1325 = vmatpush1.bf16.msra.mxu0 %v991
    %1326 = vmatprep.mubr.bf16.mxu0 %v74
    %1327 = vmatmul.mubr.bf16.gmra.mrb[0].mxu0 %v73
    %v1328 = vpop.f32.mrb[0].mxu0
    %v1329 = vadd.f32 %v1286, %v1328
    %v1330 = vpop.f32.mrb[0].mxu0
    %v1331 = vadd.f32 %v1288, %v1330
    %v1332 = vpop.f32.mrb[0].mxu0
    %v1333 = vadd.f32 %v1290, %v1332
    %v1334 = vpop.f32.mrb[0].mxu0
    %v1335 = vadd.f32 %v1292, %v1334
    %1336 = vdwg.mxu0
    %1337 = vmatprep.subr.bf16.mxu0 %v996
    %1338 = vmatpush1.bf16.msra.mxu0 %v995
    %1339 = vmatprep.subr.bf16.mxu0 %v1000
    %1340 = vmatpush1.bf16.msra.mxu0 %v999
    %1341 = vmatprep.subr.bf16.mxu0 %v1004
    %1342 = vmatpush1.bf16.msra.mxu0 %v1003
    %1343 = vmatprep.subr.bf16.mxu0 %v1008
    %1344 = vmatpush1.bf16.msra.mxu0 %v1007
    %1345 = vmatprep.subr.bf16.mxu0 %v1012
    %1346 = vmatpush1.bf16.msra.mxu0 %v1011
    %1347 = vmatprep.subr.bf16.mxu0 %v1016
    %1348 = vmatpush1.bf16.msra.mxu0 %v1015
    %1349 = vmatprep.subr.bf16.mxu0 %v1020
    %1350 = vmatpush1.bf16.msra.mxu0 %v1019
    %1351 = vmatprep.subr.bf16.mxu0 %v1024
    %1352 = vmatpush1.bf16.msra.mxu0 %v1023
    %1353 = vmatprep.subr.bf16.mxu0 %v1028
    %1354 = vmatpush1.bf16.msra.mxu0 %v1027
    %1355 = vmatprep.subr.bf16.mxu0 %v1032
    %1356 = vmatpush1.bf16.msra.mxu0 %v1031
    %1357 = vmatprep.subr.bf16.mxu0 %v1036
    %1358 = vmatpush1.bf16.msra.mxu0 %v1035
    %1359 = vmatprep.subr.bf16.mxu0 %v1040
    %1360 = vmatpush1.bf16.msra.mxu0 %v1039
    %1361 = vmatprep.subr.bf16.mxu0 %v1044
    %1362 = vmatpush1.bf16.msra.mxu0 %v1043
    %1363 = vmatprep.subr.bf16.mxu0 %v1048
    %1364 = vmatpush1.bf16.msra.mxu0 %v1047
    %1365 = vmatprep.subr.bf16.mxu0 %v1052
    %1366 = vmatpush1.bf16.msra.mxu0 %v1051
    %1367 = vmatprep.subr.bf16.mxu0 %v1056
    %1368 = vmatpush1.bf16.msra.mxu0 %v1055
    %1369 = vmatprep.mubr.bf16.mxu0 %v76
    %1370 = vmatmul.mubr.bf16.gmra.mrb[0].mxu0 %v75
    %v1371 = vpop.f32.mrb[0].mxu0
    %v1372 = vadd.f32 %v1329, %v1371
    %v1373 = vpop.f32.mrb[0].mxu0
    %v1374 = vadd.f32 %v1331, %v1373
    %v1375 = vpop.f32.mrb[0].mxu0
    %v1376 = vadd.f32 %v1333, %v1375
    %v1377 = vpop.f32.mrb[0].mxu0
    %v1378 = vadd.f32 %v1335, %v1377
    %1379 = vdwg.mxu0
    %1380 = vmatprep.subr.bf16.mxu0 %v870
    %1381 = vmatpush1.bf16.msra.mxu0 %v869
    %1382 = vmatprep.subr.bf16.mxu0 %v874
    %1383 = vmatpush1.bf16.msra.mxu0 %v873
    %1384 = vmatprep.subr.bf16.mxu0 %v878
    %1385 = vmatpush1.bf16.msra.mxu0 %v877
    %1386 = vmatprep.subr.bf16.mxu0 %v882
    %1387 = vmatpush1.bf16.msra.mxu0 %v881
    %1388 = vmatprep.subr.bf16.mxu0 %v886
    %1389 = vmatpush1.bf16.msra.mxu0 %v885
    %1390 = vmatprep.subr.bf16.mxu0 %v890
    %1391 = vmatpush1.bf16.msra.mxu0 %v889
    %1392 = vmatprep.subr.bf16.mxu0 %v894
    %1393 = vmatpush1.bf16.msra.mxu0 %v893
    %1394 = vmatprep.subr.bf16.mxu0 %v898
    %1395 = vmatpush1.bf16.msra.mxu0 %v897
    %1396 = vmatprep.subr.bf16.mxu0 %v902
    %1397 = vmatpush1.bf16.msra.mxu0 %v901
    %1398 = vmatprep.subr.bf16.mxu0 %v906
    %1399 = vmatpush1.bf16.msra.mxu0 %v905
    %1400 = vmatprep.subr.bf16.mxu0 %v910
    %1401 = vmatpush1.bf16.msra.mxu0 %v909
    %1402 = vmatprep.subr.bf16.mxu0 %v914
    %1403 = vmatpush1.bf16.msra.mxu0 %v913
    %1404 = vmatprep.subr.bf16.mxu0 %v918
    %1405 = vmatpush1.bf16.msra.mxu0 %v917
    %1406 = vmatprep.subr.bf16.mxu0 %v922
    %1407 = vmatpush1.bf16.msra.mxu0 %v921
    %1408 = vmatprep.subr.bf16.mxu0 %v926
    %1409 = vmatpush1.bf16.msra.mxu0 %v925
    %1410 = vmatprep.subr.bf16.mxu0 %v930
    %1411 = vmatpush1.bf16.msra.mxu0 %v929
    %1412 = vmatprep.mubr.bf16.mxu0 %v72
    %1413 = vmatmul.mubr.bf16.gmra.mrb[0].mxu0 %v71
    %v1414 = vpop.f32.mrb[0].mxu0
    %v1415 = vadd.f32 %v282, %v1414
    %v1416 = vpop.f32.mrb[0].mxu0
    %v1417 = vadd.f32 %v286, %v1416
    %v1418 = vpop.f32.mrb[0].mxu0
    %v1419 = vadd.f32 %v282, %v1418
    %v1420 = vpop.f32.mrb[0].mxu0
    %v1421 = vadd.f32 %v286, %v1420
    %1422 = vdwg.mxu0
    %1423 = vmatprep.subr.bf16.mxu0 %v934
    %1424 = vmatpush1.bf16.msra.mxu0 %v933
    %1425 = vmatprep.subr.bf16.mxu0 %v938
    %1426 = vmatpush1.bf16.msra.mxu0 %v937
    %1427 = vmatprep.subr.bf16.mxu0 %v942
    %1428 = vmatpush1.bf16.msra.mxu0 %v941
    %1429 = vmatprep.subr.bf16.mxu0 %v946
    %1430 = vmatpush1.bf16.msra.mxu0 %v945
    %1431 = vmatprep.subr.bf16.mxu0 %v950
    %1432 = vmatpush1.bf16.msra.mxu0 %v949
    %1433 = vmatprep.subr.bf16.mxu0 %v954
    %1434 = vmatpush1.bf16.msra.mxu0 %v953
    %1435 = vmatprep.subr.bf16.mxu0 %v958
    %1436 = vmatpush1.bf16.msra.mxu0 %v957
    %1437 = vmatprep.subr.bf16.mxu0 %v962
    %1438 = vmatpush1.bf16.msra.mxu0 %v961
    %1439 = vmatprep.subr.bf16.mxu0 %v966
    %1440 = vmatpush1.bf16.msra.mxu0 %v965
    %1441 = vmatprep.subr.bf16.mxu0 %v970
    %1442 = vmatpush1.bf16.msra.mxu0 %v969
    %1443 = vmatprep.subr.bf16.mxu0 %v974
    %1444 = vmatpush1.bf16.msra.mxu0 %v973
    %1445 = vmatprep.subr.bf16.mxu0 %v978
    %1446 = vmatpush1.bf16.msra.mxu0 %v977
    %1447 = vmatprep.subr.bf16.mxu0 %v982
    %1448 = vmatpush1.bf16.msra.mxu0 %v981
    %1449 = vmatprep.subr.bf16.mxu0 %v986
    %1450 = vmatpush1.bf16.msra.mxu0 %v985
    %1451 = vmatprep.subr.bf16.mxu0 %v990
    %1452 = vmatpush1.bf16.msra.mxu0 %v989
    %1453 = vmatprep.subr.bf16.mxu0 %v994
    %1454 = vmatpush1.bf16.msra.mxu0 %v993
    %1455 = vmatprep.mubr.bf16.mxu0 %v74
    %1456 = vmatmul.mubr.bf16.gmra.mrb[0].mxu0 %v73
    %v1457 = vpop.f32.mrb[0].mxu0
    %v1458 = vadd.f32 %v1415, %v1457
    %v1459 = vpop.f32.mrb[0].mxu0
    %v1460 = vadd.f32 %v1417, %v1459
    %v1461 = vpop.f32.mrb[0].mxu0
    %v1462 = vadd.f32 %v1419, %v1461
    %v1463 = vpop.f32.mrb[0].mxu0
    %v1464 = vadd.f32 %v1421, %v1463
    %1465 = vdwg.mxu0
    %1466 = vmatprep.subr.bf16.mxu0 %v998
    %1467 = vmatpush1.bf16.msra.mxu0 %v997
    %1468 = vmatprep.subr.bf16.mxu0 %v1002
    %1469 = vmatpush1.bf16.msra.mxu0 %v1001
    %1470 = vmatprep.subr.bf16.mxu0 %v1006
    %1471 = vmatpush1.bf16.msra.mxu0 %v1005
    %1472 = vmatprep.subr.bf16.mxu0 %v1010
    %1473 = vmatpush1.bf16.msra.mxu0 %v1009
    %1474 = vmatprep.subr.bf16.mxu0 %v1014
    %1475 = vmatpush1.bf16.msra.mxu0 %v1013
    %1476 = vmatprep.subr.bf16.mxu0 %v1018
    %1477 = vmatpush1.bf16.msra.mxu0 %v1017
    %1478 = vmatprep.subr.bf16.mxu0 %v1022
    %1479 = vmatpush1.bf16.msra.mxu0 %v1021
    %1480 = vmatprep.subr.bf16.mxu0 %v1026
    %1481 = vmatpush1.bf16.msra.mxu0 %v1025
    %1482 = vmatprep.subr.bf16.mxu0 %v1030
    %1483 = vmatpush1.bf16.msra.mxu0 %v1029
    %1484 = vmatprep.subr.bf16.mxu0 %v1034
    %1485 = vmatpush1.bf16.msra.mxu0 %v1033
    %1486 = vmatprep.subr.bf16.mxu0 %v1038
    %1487 = vmatpush1.bf16.msra.mxu0 %v1037
    %1488 = vmatprep.subr.bf16.mxu0 %v1042
    %1489 = vmatpush1.bf16.msra.mxu0 %v1041
    %1490 = vmatprep.subr.bf16.mxu0 %v1046
    %1491 = vmatpush1.bf16.msra.mxu0 %v1045
    %1492 = vmatprep.subr.bf16.mxu0 %v1050
    %1493 = vmatpush1.bf16.msra.mxu0 %v1049
    %1494 = vmatprep.subr.bf16.mxu0 %v1054
    %1495 = vmatpush1.bf16.msra.mxu0 %v1053
    %1496 = vmatprep.subr.bf16.mxu0 %v1058
    %1497 = vmatpush1.bf16.msra.mxu0 %v1057
    %1498 = vmatprep.mubr.bf16.mxu0 %v76
    %1499 = vmatmul.mubr.bf16.gmra.mrb[0].mxu0 %v75
    %v1500 = vpop.f32.mrb[0].mxu0
    %v1501 = vadd.f32 %v1458, %v1500
    %v1502 = vpop.f32.mrb[0].mxu0
    %v1503 = vadd.f32 %v1460, %v1502
    %v1504 = vpop.f32.mrb[0].mxu0
    %v1505 = vadd.f32 %v1462, %v1504
    %v1506 = vpop.f32.mrb[0].mxu0
    %v1507 = vadd.f32 %v1464, %v1506
    %1508 = vdwg.mxu0
    %v1509 = vld [vmem:[#allocation7] sm:$0xff]
    %v1510 = vld [vmem:[#allocation7 + $0x8] sm:$0xff]
    %v1511 = vld [vmem:[#allocation7 + $0x10] sm:$0xff]
    %v1512 = vld [vmem:[#allocation7 + $0x18] sm:$0xff]
    %v1513 = vld [vmem:[#allocation7 + $0x20] sm:$0xff]
    %v1514 = vld [vmem:[#allocation7 + $0x28] sm:$0xff]
    %v1515 = vld [vmem:[#allocation7 + $0x30] sm:$0xff]
    %v1516 = vld [vmem:[#allocation7 + $0x38] sm:$0xff]
    %v1517 = vadd.f32 %v1372, %v1509
    %v1518 = vadd.f32 %v1374, %v1510
    %v1519 = vadd.f32 %v1501, %v1511
    %v1520 = vadd.f32 %v1503, %v1512
    %v1521 = vadd.f32 %v1376, %v1513
    %v1522 = vadd.f32 %v1378, %v1514
    %v1523 = vadd.f32 %v1505, %v1515
    %v1524 = vadd.f32 %v1507, %v1516
    %1525 = vst [vmem:[#allocation8] sm:$0xff] %v1517
    %1526 = vst [vmem:[#allocation8 + $0x8] sm:$0xff] %v1518
    %1527 = vst [vmem:[#allocation8 + $0x10] sm:$0xff] %v1519
    %1528 = vst [vmem:[#allocation8 + $0x18] sm:$0xff] %v1520
    %1529 = vst [vmem:[#allocation8 + $0x20] sm:$0xff] %v1521
    %1530 = vst [vmem:[#allocation8 + $0x28] sm:$0xff] %v1522
    %1531 = vst [vmem:[#allocation8 + $0x30] sm:$0xff] %v1523
    %1532 = vst [vmem:[#allocation8 + $0x38] sm:$0xff] %v1524
    // Predicated region
    $region30: #{tpu_custom_call.1} parent=1 // pred_check
      _
    $region31: #{tpu_custom_call.1} parent=1 // pred_check_branch
      %1534 = sbr.rel (0) target = $region33
    $region32: #{tpu_custom_call.1} parent=1 // pred_region
      %s1536 = ssub.s32 1024, 1024
      %1537 = vsyncadd [#allocation4], %s1536
      %s1538 = sshll.u32 [#allocation8], 4
      %s1539 = int_to_ptr.vmem [resolvable:$true] %s1538
      %1544 = dma.vmem_to_hbm [thread:$0]  %s1539, 1024, %s4, [#allocation4], 512, 512, 32
    $region33: #{tpu_custom_call.1} parent=1 // pred_fallthru
      _
    // Predicated region
    $region34: #{tpu_custom_call.1} parent=1 // pred_check
      _
    $region35: #{tpu_custom_call.1} parent=1 // pred_check_branch
      %1546 = sbr.rel (0) target = $region37
    $region36: #{tpu_custom_call.1} parent=1 // pred_region
      %1547 = dma.done [#allocation4], 1024
    $region37: #{tpu_custom_call.1} parent=1 // pred_fallthru
      _
    %1548 = vsyncpa [#allocation3], 1
    %1549 = vsyncpa [#allocation6], 1
    %1550 = vsyncpa [#allocation4], 1

</llo_original>
